<compile_context>
chip_gen: v5e
topology: v5e:2x2
jax: 0.10.0
libtpu: 0.0.40
codegen_flags: <defaults>
</compile_context>

<pallas_src>
import functools
import math

import jax
import jax.numpy as jnp
from jax.experimental import pallas as pl
from jax.experimental.pallas import tpu as pltpu


# ---------------------------------------------------------------------------
# Small helpers
# ---------------------------------------------------------------------------
def _round_up(v, m):
    return ((v + m - 1) // m) * m


def _pick_tile(dim, base, cap):
    """Largest divisor of `dim` that is a multiple of `base` and <= cap.

    Falls back to the full dimension, which is always a legal TPU block extent
    (avoids pad-then-slice HBM round trips for non-tile-multiple shapes)."""
    best = None
    hi = min(dim, cap)
    for cand in range(base, hi + 1, base):
        if dim % cand == 0:
            best = cand
    return dim if best is None else best


def _vmem_capacity_bytes():
    """Physical VMEM of the current chip; conservative (v7x) fallback."""
    cap = 64 * 1024 * 1024
    try:
        info = pltpu.get_tpu_info()
        cap = int(getattr(info, "vmem_capacity_bytes", cap) or cap)
    except Exception:
        pass
    return cap


def _vmem_limit_bytes(est_bytes):
    """Generation-aware scoped-VMEM request (never more than half of physical)."""
    want = max(2 * int(est_bytes), 16 * 1024 * 1024)
    return int(min(want, _vmem_capacity_bytes() // 2))


def _approx_reciprocal(x):
    if hasattr(pl, "reciprocal"):
        return pl.reciprocal(x, approx=True)   # EUP slot -> nearly free
    return 1.0 / x


# ---------------------------------------------------------------------------
# Kernel 1: fused QKV projection written head-major:  (3H, M, hd)
# ---------------------------------------------------------------------------
def _qkv_proj_kernel(*refs, grp, has_bias):
    if has_bias:
        x_ref, w_ref, b_ref, o_ref, acc_ref = refs
    else:
        x_ref, w_ref, o_ref, acc_ref = refs
        b_ref = None

    @pl.when(pl.program_id(2) == 0)
    def _init():
        acc_ref[...] = jnp.zeros_like(acc_ref)

    x = x_ref[...]                                   # (tm, tk), input dtype (no f32 up-cast)
    for h in range(grp):                             # grp head-columns share one x tile
        acc_ref[h] += jnp.dot(x, w_ref[h], preferred_element_type=jnp.float32)

    @pl.when(pl.program_id(2) == pl.num_programs(2) - 1)
    def _store():
        acc = acc_ref[...]
        if has_bias:
            acc = acc + b_ref[...].astype(jnp.float32)
        o_ref[...] = acc.astype(o_ref.dtype)


def qkv_projection(x2, w_qkv, b_qkv, *, tm_max=512, tk_max=1024):
    """x2 (M, d_in) @ w_qkv (3H, d_in, hd) [+ b_qkv (3H,1,hd)] -> (3H, M, hd)."""
    M, d_in = x2.shape
    n_cols, _, hd = w_qkv.shape
    tm = _pick_tile(M, 8, tm_max)
    tk = _pick_tile(d_in, 128, tk_max)                 # full d_in when not 128-aligned
    grp = _pick_tile(n_cols, 1, max(1, 256 // hd))     # head-columns per grid step
    grid = (M // tm, n_cols // grp, d_in // tk)

    isz = jnp.dtype(x2.dtype).itemsize
    hd_p = _round_up(hd, 128)
    est = (2 * isz * (tm * tk + grp * tk * hd_p + grp * tm * hd_p + grp * 8 * hd_p)
           + 4 * grp * tm * hd_p)

    in_specs = [
        pl.BlockSpec((tm, tk), lambda i, j, k: (i, k)),
        pl.BlockSpec((grp, tk, hd), lambda i, j, k: (j, k, 0)),
    ]
    args = [x2, w_qkv]
    if b_qkv is not None:
        in_specs.append(pl.BlockSpec((grp, 1, hd), lambda i, j, k: (j, 0, 0)))
        args.append(b_qkv)

    kern = functools.partial(_qkv_proj_kernel, grp=grp, has_bias=b_qkv is not None)
    # TODO(synk): for head_dim < 256 each per-head dot under-fills the MXU N
    # dimension; a lane-packed (grouped-head) variant would improve utilization.
    return pl.pallas_call(
        kern,
        out_shape=jax.ShapeDtypeStruct((n_cols, M, hd), x2.dtype),
        grid_spec=pltpu.PrefetchScalarGridSpec(
            num_scalar_prefetch=0,
            grid=grid,
            in_specs=in_specs,
            out_specs=pl.BlockSpec((grp, tm, hd), lambda i, j, k: (j, i, 0)),
            scratch_shapes=[pltpu.VMEM((grp, tm, hd), jnp.float32)],
        ),
        compiler_params=pltpu.CompilerParams(
            dimension_semantics=("parallel", "parallel", "arbitrary"),
            vmem_limit_bytes=_vmem_limit_bytes(est),
        ),
    )(*args)


# ---------------------------------------------------------------------------
# Kernel 2: flash attention (online softmax) over head-major QKV
# ---------------------------------------------------------------------------
def _flash_attn_kernel(q_ref, k_ref, v_ref, o_ref, m_sc, l_sc, acc_sc, *,
                       scale, causal, tq, tkv, t_valid, t_pad):
    ki = pl.program_id(3)

    @pl.when(ki == 0)
    def _init():
        m_sc[...] = jnp.full(m_sc.shape, -jnp.inf, dtype=m_sc.dtype)
        l_sc[...] = jnp.zeros_like(l_sc)
        acc_sc[...] = jnp.zeros_like(acc_sc)

    q_start = pl.program_id(2) * tq
    kv_start = ki * tkv

    def _compute():
        # MXU operands stay in the input dtype; accumulation in f32.
        s = jnp.einsum("gqd,gkd->gqk", q_ref[...], k_ref[...],
                       preferred_element_type=jnp.float32) * scale
        need_len_mask = t_valid != t_pad
        if causal or need_len_mask:
            col = kv_start + jax.lax.broadcasted_iota(jnp.int32, s.shape, 2)
            if causal:
                row = q_start + jax.lax.broadcasted_iota(jnp.int32, s.shape, 1)
                invalid = col > row
                if need_len_mask:
                    invalid = invalid | (col >= t_valid)
            else:
                invalid = col >= t_valid
            s = jnp.where(invalid, -1e30, s)           # softmax math stays in f32
        m_prev = m_sc[...]
        m_new = jnp.maximum(m_prev, jnp.max(s, axis=-1, keepdims=True))
        alpha = jnp.exp(m_prev - m_new)
        p = jnp.exp(s - m_new)
        l_sc[...] = alpha * l_sc[...] + jnp.sum(p, axis=-1, keepdims=True)
        acc_sc[...] = alpha * acc_sc[...] + jnp.einsum(
            "gqk,gkd->gqd", p.astype(v_ref.dtype), v_ref[...],
            preferred_element_type=jnp.float32)
        m_sc[...] = m_new

    if causal:
        # Skip KV blocks entirely above the diagonal (~2x fewer MXU/softmax ops).
        @pl.when(kv_start < q_start + tq)
        def _():
            _compute()
    else:
        _compute()

    @pl.when(ki == pl.num_programs(3) - 1)
    def _finalize():
        inv_l = _approx_reciprocal(l_sc[...])
        o_ref[...] = (acc_sc[...] * inv_l).astype(o_ref.dtype)


def flash_attention(qkv_heads, *, batch, seq, num_heads, head_dim, causal, t_valid):
    """qkv_heads (3H, B*T, hd) -> ctx_heads (H, B*T, hd)."""
    n3h, M, hd = qkv_heads.shape
    H = num_heads
    assert n3h == 3 * H and M == batch * seq and hd == head_dim

    tq = _pick_tile(seq, 8, 256)
    tkv = _pick_tile(seq, 8, 256)
    gh = _pick_tile(H, 1, 8)          # heads per grid step (amortizes grid overhead)
    nq, nk = seq // tq, seq // tkv
    n_hgrp = H // gh
    grid = (batch, n_hgrp, nq, nk)
    scale = 1.0 / math.sqrt(hd)

    isz = jnp.dtype(qkv_heads.dtype).itemsize
    hd_p = _round_up(hd, 128)
    tkv_p = _round_up(tkv, 128)
    est = (2 * isz * gh * (2 * tq * hd_p + 2 * tkv * hd_p)     # q, k, v, out (dbl-buffered)
           + 4 * gh * (tq * hd_p + 2 * tq * 128)               # acc, m, l scratch
           + 2 * 4 * gh * tq * tkv_p)                          # score / prob temporaries

    kern = functools.partial(_flash_attn_kernel, scale=scale, causal=causal,
                             tq=tq, tkv=tkv, t_valid=t_valid, t_pad=seq)
    # TODO(synk): when head_dim < 128, packing multiple heads into the lane dim
    # would give lane-dense (128-wide) output stores; kept head-major for clarity.
    return pl.pallas_call(
        kern,
        out_shape=jax.ShapeDtypeStruct((H, M, hd), qkv_heads.dtype),
        grid_spec=pltpu.PrefetchScalarGridSpec(
            num_scalar_prefetch=0,
            grid=grid,
            in_specs=[
                pl.BlockSpec((gh, tq, hd),
                             lambda b, hg, qi, ki: (hg, b * nq + qi, 0)),
                pl.BlockSpec((gh, tkv, hd),
                             lambda b, hg, qi, ki: (n_hgrp + hg, b * nk + ki, 0)),
                pl.BlockSpec((gh, tkv, hd),
                             lambda b, hg, qi, ki: (2 * n_hgrp + hg, b * nk + ki, 0)),
            ],
            out_specs=pl.BlockSpec((gh, tq, hd),
                                   lambda b, hg, qi, ki: (hg, b * nq + qi, 0)),
            scratch_shapes=[
                pltpu.VMEM((gh, tq, 1), jnp.float32),   # running max m
                pltpu.VMEM((gh, tq, 1), jnp.float32),   # running denom l
                pltpu.VMEM((gh, tq, hd), jnp.float32),  # running output acc
            ],
        ),
        compiler_params=pltpu.CompilerParams(
            dimension_semantics=("parallel", "parallel", "parallel", "arbitrary"),
            vmem_limit_bytes=_vmem_limit_bytes(est),
        ),
    )(qkv_heads, qkv_heads, qkv_heads)


# ---------------------------------------------------------------------------
# Kernel 3: output projection consuming head-major context
# ---------------------------------------------------------------------------
def _out_proj_kernel(*refs, grp, has_bias):
    if has_bias:
        c_ref, w_ref, b_ref, o_ref, acc_ref = refs
    else:
        c_ref, w_ref, o_ref, acc_ref = refs
        b_ref = None

    @pl.when(pl.program_id(2) == 0)
    def _init():
        acc_ref[...] = jnp.zeros_like(acc_ref)

    for h in range(grp):
        acc_ref[...] += jnp.dot(c_ref[h], w_ref[h], preferred_element_type=jnp.float32)

    @pl.when(pl.program_id(2) == pl.num_programs(2) - 1)
    def _store():
        acc = acc_ref[...]
        if has_bias:
            acc = acc + b_ref[...].astype(jnp.float32)
        o_ref[...] = acc.astype(o_ref.dtype)


def out_projection(ctx_heads, wo_heads, b_out, *, tm_max=512, tn_max=512):
    """ctx_heads (H, M, hd) @ wo_heads (H, hd, d_out) [+ b_out (1, d_out)] -> (M, d_out)."""
    H, M, hd = ctx_heads.shape
    _, _, d_out = wo_heads.shape
    tm = _pick_tile(M, 8, tm_max)
    tn = _pick_tile(d_out, 128, tn_max)                # full d_out when not 128-aligned
    grp = _pick_tile(H, 1, max(1, 256 // hd))          # heads contracted per grid step
    grid = (M // tm, d_out // tn, H // grp)

    isz = jnp.dtype(ctx_heads.dtype).itemsize
    hd_p = _round_up(hd, 128)
    est = (2 * isz * (grp * tm * hd_p + grp * hd_p * tn + tm * tn + 8 * tn)
           + 4 * tm * tn)

    in_specs = [
        pl.BlockSpec((grp, tm, hd), lambda i, j, k: (k, i, 0)),
        pl.BlockSpec((grp, hd, tn), lambda i, j, k: (k, 0, j)),
    ]
    args = [ctx_heads, wo_heads]
    if b_out is not None:
        in_specs.append(pl.BlockSpec((1, tn), lambda i, j, k: (0, j)))
        args.append(b_out)

    kern = functools.partial(_out_proj_kernel, grp=grp, has_bias=b_out is not None)
    return pl.pallas_call(
        kern,
        out_shape=jax.ShapeDtypeStruct((M, d_out), ctx_heads.dtype),
        grid_spec=pltpu.PrefetchScalarGridSpec(
            num_scalar_prefetch=0,
            grid=grid,
            in_specs=in_specs,
            out_specs=pl.BlockSpec((tm, tn), lambda i, j, k: (i, j)),
            scratch_shapes=[pltpu.VMEM((tm, tn), jnp.float32)],
        ),
        compiler_params=pltpu.CompilerParams(
            dimension_semantics=("parallel", "parallel", "arbitrary"),
            vmem_limit_bytes=_vmem_limit_bytes(est),
        ),
    )(*args)


# ---------------------------------------------------------------------------
# Parameter preparation (one-time, hoisted out of the forward path)
# ---------------------------------------------------------------------------
def prepare_mha_params(params, num_heads):
    Wq, Wk, Wv = params["W_query"], params["W_key"], params["W_value"]
    Wo, bo = params["out_proj_w"], params["out_proj_b"]
    d_out, d_in = Wq.shape
    H = num_heads
    hd = d_out // H
    # nn.Linear weight is (out_features, in_features); y = x @ W^T.
    w_stack = jnp.concatenate([Wq, Wk, Wv], axis=0)                 # (3*d_out, d_in)
    w_qkv = w_stack.reshape(3 * H, hd, d_in).transpose(0, 2, 1)     # (3H, d_in, hd)
    bq, bk, bv = params.get("b_query"), params.get("b_key"), params.get("b_value")
    if bq is not None:
        b_qkv = jnp.concatenate([bq, bk, bv], axis=0).reshape(3 * H, 1, hd)
    else:
        b_qkv = None
    wo_heads = Wo.T.reshape(H, hd, d_out)                           # (H, hd, d_out)
    b_out = bo.reshape(1, d_out) if bo is not None else None
    return dict(w_qkv=w_qkv, b_qkv=b_qkv, wo_heads=wo_heads, b_out=b_out,
                num_heads=H, head_dim=hd, d_in=d_in, d_out=d_out)


# ---------------------------------------------------------------------------
# Full MultiHeadAttention forward
# ---------------------------------------------------------------------------
def multi_head_attention(x, prepared, *, disable_causal_mask=False):
    B, T, d_in = x.shape
    H = prepared["num_heads"]
    hd = prepared["head_dim"]
    d_out = prepared["d_out"]
    assert d_in == prepared["d_in"]

    # Keep sequence tiles sublane-aligned; only pads for unusual T.
    Tp = _round_up(max(T, 1), 8)
    if Tp != T:
        x = jnp.pad(x, ((0, 0), (0, Tp - T), (0, 0)))
    x2 = x.reshape(B * Tp, d_in)

    qkv_heads = qkv_projection(x2, prepared["w_qkv"], prepared["b_qkv"])
    ctx_heads = flash_attention(qkv_heads, batch=B, seq=Tp, num_heads=H,
                                head_dim=hd, causal=not disable_causal_mask,
                                t_valid=T)
    # TODO(synk): train-mode nn.Dropout on attention weights omitted (eval forward: identity).
    out = out_projection(ctx_heads, prepared["wo_heads"], prepared["b_out"])
    out = out.reshape(B, Tp, d_out)
    if Tp != T:
        out = out[:, :T]
    return out


if __name__ == "__main__":
    B, T, d_in, d_out, num_heads = 2, 8, 32, 32, 4

    key = jax.random.PRNGKey(0)
    kx, kq, kk_, kv, ko, kb = jax.random.split(key, 6)
    x = jax.random.normal(kx, (B, T, d_in), dtype=jnp.float32)
    # nn.Linear weights are (out_features, in_features); qkv_bias=False.
    Wq = 0.1 * jax.random.normal(kq, (d_out, d_in), dtype=jnp.float32)
    Wk = 0.1 * jax.random.normal(kk_, (d_out, d_in), dtype=jnp.float32)
    Wv = 0.1 * jax.random.normal(kv, (d_out, d_in), dtype=jnp.float32)
    Wo = 0.1 * jax.random.normal(ko, (d_out, d_out), dtype=jnp.float32)
    bo = 0.1 * jax.random.normal(kb, (d_out,), dtype=jnp.float32)

    params = dict(W_query=Wq, W_key=Wk, W_value=Wv, out_proj_w=Wo, out_proj_b=bo)
    prepared = prepare_mha_params(params, num_heads)   # one-time weight prep

    out = jax.block_until_ready(multi_head_attention(x, prepared))

    # Pure-JAX reference mirroring the PyTorch forward (eval mode, dropout = identity).
    def ref_mha(x, causal=True):
        hd = d_out // num_heads
        q, k, v = x @ Wq.T, x @ Wk.T, x @ Wv.T

        def heads(t):
            return t.reshape(B, T, num_heads, hd).transpose(0, 2, 1, 3)

        q, k, v = heads(q), heads(k), heads(v)
        scores = jnp.einsum("bhqd,bhkd->bhqk", q, k)
        if causal:
            mask = jnp.triu(jnp.ones((T, T), dtype=bool), k=1)
            scores = jnp.where(mask, -jnp.inf, scores)
        w = jax.nn.softmax(scores / (hd ** 0.5), axis=-1)
        ctx = jnp.einsum("bhqk,bhkd->bhqd", w, v)
        ctx = ctx.transpose(0, 2, 1, 3).reshape(B, T, d_out)
        return ctx @ Wo.T + bo

    ref = ref_mha(x)
    assert out.shape == (B, T, d_out) and out.dtype == x.dtype
    err = float(jnp.max(jnp.abs(out - ref)))
    # slightly looser tolerance: approx reciprocal in the softmax normalization
    assert jnp.allclose(out, ref, atol=2e-3, rtol=2e-3), err

    out_nc = jax.block_until_ready(
        multi_head_attention(x, prepared, disable_causal_mask=True))
    ref_nc = ref_mha(x, causal=False)
    err_nc = float(jnp.max(jnp.abs(out_nc - ref_nc)))
    assert jnp.allclose(out_nc, ref_nc, atol=2e-3, rtol=2e-3), err_nc

    print("KERNEL_OK")
</pallas_src>

<mosaic_0001>
module attributes {stable_mosaic.version = 11 : i64} {
  func.func @_qkv_proj_kernel(%arg0: i32, %arg1: i32, %arg2: i32, %arg3: memref<16x32xf32, #tpu.memory_space<vmem>>, %arg4: memref<12x32x8xf32, #tpu.memory_space<vmem>>, %arg5: memref<12x16x8xf32, #tpu.memory_space<vmem>>, %arg6: memref<12x16x8xf32, #tpu.memory_space<vmem>>) attributes {dimension_semantics = [#tpu.dimension_semantics<parallel>, #tpu.dimension_semantics<parallel>, #tpu.dimension_semantics<arbitrary>], iteration_bounds = array<i64: 1, 1, 1>, scalar_prefetch = 0 : i64, scratch_operands = 1 : i64, tpu.core_type = #tpu.core_type<tc>, window_params = [{transform_indices = @transform_0, window_bounds = array<i64: 16, 32>}, {transform_indices = @transform_1, window_bounds = array<i64: 12, 32, 8>}, {transform_indices = @transform_2, window_bounds = array<i64: 12, 16, 8>}]} {
    %c0_i32 = arith.constant 0 : i32
    %0 = arith.cmpi eq, %arg2, %c0_i32 : i32
    %1 = arith.extui %0 : i1 to i32
    %c0_i32_0 = arith.constant 0 : i32
    %2 = arith.cmpi ne, %1, %c0_i32_0 : i32
    scf.if %2 {
      %cst_112 = arith.constant 0.000000e+00 : f32
      %115 = vector.broadcast %cst_112 : f32 to vector<12x16x8xf32>
      %c0_113 = arith.constant 0 : index
      %c0_114 = arith.constant 0 : index
      %c0_115 = arith.constant 0 : index
      %116 = vector.load %arg6[%c0_113, %c0_114, %c0_115] : memref<12x16x8xf32, #tpu.memory_space<vmem>>, vector<12x16x8xf32>
      tpu.vector_store %arg6[%c0_113, %c0_114, %c0_115], %115 {strides = array<i32>} : memref<12x16x8xf32, #tpu.memory_space<vmem>>, vector<12x16x8xf32>,
    } else {
    }
    %c0 = arith.constant 0 : index
    %c0_1 = arith.constant 0 : index
    %3 = vector.load %arg3[%c0, %c0_1] : memref<16x32xf32, #tpu.memory_space<vmem>>, vector<16x32xf32>
    %c0_2 = arith.constant 0 : index
    %c0_3 = arith.constant 0 : index
    %c0_4 = arith.constant 0 : index
    %4 = vector.load %arg6[%c0_2, %c0_3, %c0_4] : memref<12x16x8xf32, #tpu.memory_space<vmem>>, vector<1x16x8xf32>
    %5 = vector.shape_cast %4 : vector<1x16x8xf32> to vector<16x8xf32>
    %c0_5 = arith.constant 0 : index
    %c0_6 = arith.constant 0 : index
    %c0_7 = arith.constant 0 : index
    %6 = vector.load %arg4[%c0_5, %c0_6, %c0_7] : memref<12x32x8xf32, #tpu.memory_space<vmem>>, vector<1x32x8xf32>
    %7 = vector.shape_cast %6 : vector<1x32x8xf32> to vector<32x8xf32>
    %cst = arith.constant dense<0.000000e+00> : vector<16x8xf32>
    %8 = tpu.matmul %3, %7, %cst {dimension_numbers = #tpu.dot_dimension_numbers<[1], [0], [0], [1], [0, 0, 1, 1], [], []>} : vector<16x32xf32>, vector<32x8xf32>, vector<16x8xf32> -> vector<16x8xf32>
    %9 = arith.addf %5, %8 : vector<16x8xf32>
    %c0_8 = arith.constant 0 : index
    %c0_9 = arith.constant 0 : index
    %c0_10 = arith.constant 0 : index
    %10 = vector.load %arg6[%c0_8, %c0_9, %c0_10] : memref<12x16x8xf32, #tpu.memory_space<vmem>>, vector<1x16x8xf32>
    %11 = vector.shape_cast %10 : vector<1x16x8xf32> to vector<16x8xf32>
    %12 = vector.shape_cast %9 : vector<16x8xf32> to vector<1x16x8xf32>
    tpu.vector_store %arg6[%c0_8, %c0_9, %c0_10], %12 {strides = array<i32>} : memref<12x16x8xf32, #tpu.memory_space<vmem>>, vector<1x16x8xf32>,
    %c1 = arith.constant 1 : index
    %c0_11 = arith.constant 0 : index
    %c0_12 = arith.constant 0 : index
    %13 = vector.load %arg6[%c1, %c0_11, %c0_12] : memref<12x16x8xf32, #tpu.memory_space<vmem>>, vector<1x16x8xf32>
    %14 = vector.shape_cast %13 : vector<1x16x8xf32> to vector<16x8xf32>
    %c1_13 = arith.constant 1 : index
    %c0_14 = arith.constant 0 : index
    %c0_15 = arith.constant 0 : index
    %15 = vector.load %arg4[%c1_13, %c0_14, %c0_15] : memref<12x32x8xf32, #tpu.memory_space<vmem>>, vector<1x32x8xf32>
    %16 = vector.shape_cast %15 : vector<1x32x8xf32> to vector<32x8xf32>
    %cst_16 = arith.constant dense<0.000000e+00> : vector<16x8xf32>
    %17 = tpu.matmul %3, %16, %cst_16 {dimension_numbers = #tpu.dot_dimension_numbers<[1], [0], [0], [1], [0, 0, 1, 1], [], []>} : vector<16x32xf32>, vector<32x8xf32>, vector<16x8xf32> -> vector<16x8xf32>
    %18 = arith.addf %14, %17 : vector<16x8xf32>
    %c1_17 = arith.constant 1 : index
    %c0_18 = arith.constant 0 : index
    %c0_19 = arith.constant 0 : index
    %19 = vector.load %arg6[%c1_17, %c0_18, %c0_19] : memref<12x16x8xf32, #tpu.memory_space<vmem>>, vector<1x16x8xf32>
    %20 = vector.shape_cast %19 : vector<1x16x8xf32> to vector<16x8xf32>
    %21 = vector.shape_cast %18 : vector<16x8xf32> to vector<1x16x8xf32>
    tpu.vector_store %arg6[%c1_17, %c0_18, %c0_19], %21 {strides = array<i32>} : memref<12x16x8xf32, #tpu.memory_space<vmem>>, vector<1x16x8xf32>,
    %c2 = arith.constant 2 : index
    %c0_20 = arith.constant 0 : index
    %c0_21 = arith.constant 0 : index
    %22 = vector.load %arg6[%c2, %c0_20, %c0_21] : memref<12x16x8xf32, #tpu.memory_space<vmem>>, vector<1x16x8xf32>
    %23 = vector.shape_cast %22 : vector<1x16x8xf32> to vector<16x8xf32>
    %c2_22 = arith.constant 2 : index
    %c0_23 = arith.constant 0 : index
    %c0_24 = arith.constant 0 : index
    %24 = vector.load %arg4[%c2_22, %c0_23, %c0_24] : memref<12x32x8xf32, #tpu.memory_space<vmem>>, vector<1x32x8xf32>
    %25 = vector.shape_cast %24 : vector<1x32x8xf32> to vector<32x8xf32>
    %cst_25 = arith.constant dense<0.000000e+00> : vector<16x8xf32>
    %26 = tpu.matmul %3, %25, %cst_25 {dimension_numbers = #tpu.dot_dimension_numbers<[1], [0], [0], [1], [0, 0, 1, 1], [], []>} : vector<16x32xf32>, vector<32x8xf32>, vector<16x8xf32> -> vector<16x8xf32>
    %27 = arith.addf %23, %26 : vector<16x8xf32>
    %c2_26 = arith.constant 2 : index
    %c0_27 = arith.constant 0 : index
    %c0_28 = arith.constant 0 : index
    %28 = vector.load %arg6[%c2_26, %c0_27, %c0_28] : memref<12x16x8xf32, #tpu.memory_space<vmem>>, vector<1x16x8xf32>
    %29 = vector.shape_cast %28 : vector<1x16x8xf32> to vector<16x8xf32>
    %30 = vector.shape_cast %27 : vector<16x8xf32> to vector<1x16x8xf32>
    tpu.vector_store %arg6[%c2_26, %c0_27, %c0_28], %30 {strides = array<i32>} : memref<12x16x8xf32, #tpu.memory_space<vmem>>, vector<1x16x8xf32>,
    %c3 = arith.constant 3 : index
    %c0_29 = arith.constant 0 : index
    %c0_30 = arith.constant 0 : index
    %31 = vector.load %arg6[%c3, %c0_29, %c0_30] : memref<12x16x8xf32, #tpu.memory_space<vmem>>, vector<1x16x8xf32>
    %32 = vector.shape_cast %31 : vector<1x16x8xf32> to vector<16x8xf32>
    %c3_31 = arith.constant 3 : index
    %c0_32 = arith.constant 0 : index
    %c0_33 = arith.constant 0 : index
    %33 = vector.load %arg4[%c3_31, %c0_32, %c0_33] : memref<12x32x8xf32, #tpu.memory_space<vmem>>, vector<1x32x8xf32>
    %34 = vector.shape_cast %33 : vector<1x32x8xf32> to vector<32x8xf32>
    %cst_34 = arith.constant dense<0.000000e+00> : vector<16x8xf32>
    %35 = tpu.matmul %3, %34, %cst_34 {dimension_numbers = #tpu.dot_dimension_numbers<[1], [0], [0], [1], [0, 0, 1, 1], [], []>} : vector<16x32xf32>, vector<32x8xf32>, vector<16x8xf32> -> vector<16x8xf32>
    %36 = arith.addf %32, %35 : vector<16x8xf32>
    %c3_35 = arith.constant 3 : index
    %c0_36 = arith.constant 0 : index
    %c0_37 = arith.constant 0 : index
    %37 = vector.load %arg6[%c3_35, %c0_36, %c0_37] : memref<12x16x8xf32, #tpu.memory_space<vmem>>, vector<1x16x8xf32>
    %38 = vector.shape_cast %37 : vector<1x16x8xf32> to vector<16x8xf32>
    %39 = vector.shape_cast %36 : vector<16x8xf32> to vector<1x16x8xf32>
    tpu.vector_store %arg6[%c3_35, %c0_36, %c0_37], %39 {strides = array<i32>} : memref<12x16x8xf32, #tpu.memory_space<vmem>>, vector<1x16x8xf32>,
    %c4 = arith.constant 4 : index
    %c0_38 = arith.constant 0 : index
    %c0_39 = arith.constant 0 : index
    %40 = vector.load %arg6[%c4, %c0_38, %c0_39] : memref<12x16x8xf32, #tpu.memory_space<vmem>>, vector<1x16x8xf32>
    %41 = vector.shape_cast %40 : vector<1x16x8xf32> to vector<16x8xf32>
    %c4_40 = arith.constant 4 : index
    %c0_41 = arith.constant 0 : index
    %c0_42 = arith.constant 0 : index
    %42 = vector.load %arg4[%c4_40, %c0_41, %c0_42] : memref<12x32x8xf32, #tpu.memory_space<vmem>>, vector<1x32x8xf32>
    %43 = vector.shape_cast %42 : vector<1x32x8xf32> to vector<32x8xf32>
    %cst_43 = arith.constant dense<0.000000e+00> : vector<16x8xf32>
    %44 = tpu.matmul %3, %43, %cst_43 {dimension_numbers = #tpu.dot_dimension_numbers<[1], [0], [0], [1], [0, 0, 1, 1], [], []>} : vector<16x32xf32>, vector<32x8xf32>, vector<16x8xf32> -> vector<16x8xf32>
    %45 = arith.addf %41, %44 : vector<16x8xf32>
    %c4_44 = arith.constant 4 : index
    %c0_45 = arith.constant 0 : index
    %c0_46 = arith.constant 0 : index
    %46 = vector.load %arg6[%c4_44, %c0_45, %c0_46] : memref<12x16x8xf32, #tpu.memory_space<vmem>>, vector<1x16x8xf32>
    %47 = vector.shape_cast %46 : vector<1x16x8xf32> to vector<16x8xf32>
    %48 = vector.shape_cast %45 : vector<16x8xf32> to vector<1x16x8xf32>
    tpu.vector_store %arg6[%c4_44, %c0_45, %c0_46], %48 {strides = array<i32>} : memref<12x16x8xf32, #tpu.memory_space<vmem>>, vector<1x16x8xf32>,
    %c5 = arith.constant 5 : index
    %c0_47 = arith.constant 0 : index
    %c0_48 = arith.constant 0 : index
    %49 = vector.load %arg6[%c5, %c0_47, %c0_48] : memref<12x16x8xf32, #tpu.memory_space<vmem>>, vector<1x16x8xf32>
    %50 = vector.shape_cast %49 : vector<1x16x8xf32> to vector<16x8xf32>
    %c5_49 = arith.constant 5 : index
    %c0_50 = arith.constant 0 : index
    %c0_51 = arith.constant 0 : index
    %51 = vector.load %arg4[%c5_49, %c0_50, %c0_51] : memref<12x32x8xf32, #tpu.memory_space<vmem>>, vector<1x32x8xf32>
    %52 = vector.shape_cast %51 : vector<1x32x8xf32> to vector<32x8xf32>
    %cst_52 = arith.constant dense<0.000000e+00> : vector<16x8xf32>
    %53 = tpu.matmul %3, %52, %cst_52 {dimension_numbers = #tpu.dot_dimension_numbers<[1], [0], [0], [1], [0, 0, 1, 1], [], []>} : vector<16x32xf32>, vector<32x8xf32>, vector<16x8xf32> -> vector<16x8xf32>
    %54 = arith.addf %50, %53 : vector<16x8xf32>
    %c5_53 = arith.constant 5 : index
    %c0_54 = arith.constant 0 : index
    %c0_55 = arith.constant 0 : index
    %55 = vector.load %arg6[%c5_53, %c0_54, %c0_55] : memref<12x16x8xf32, #tpu.memory_space<vmem>>, vector<1x16x8xf32>
    %56 = vector.shape_cast %55 : vector<1x16x8xf32> to vector<16x8xf32>
    %57 = vector.shape_cast %54 : vector<16x8xf32> to vector<1x16x8xf32>
    tpu.vector_store %arg6[%c5_53, %c0_54, %c0_55], %57 {strides = array<i32>} : memref<12x16x8xf32, #tpu.memory_space<vmem>>, vector<1x16x8xf32>,
    %c6 = arith.constant 6 : index
    %c0_56 = arith.constant 0 : index
    %c0_57 = arith.constant 0 : index
    %58 = vector.load %arg6[%c6, %c0_56, %c0_57] : memref<12x16x8xf32, #tpu.memory_space<vmem>>, vector<1x16x8xf32>
    %59 = vector.shape_cast %58 : vector<1x16x8xf32> to vector<16x8xf32>
    %c6_58 = arith.constant 6 : index
    %c0_59 = arith.constant 0 : index
    %c0_60 = arith.constant 0 : index
    %60 = vector.load %arg4[%c6_58, %c0_59, %c0_60] : memref<12x32x8xf32, #tpu.memory_space<vmem>>, vector<1x32x8xf32>
    %61 = vector.shape_cast %60 : vector<1x32x8xf32> to vector<32x8xf32>
    %cst_61 = arith.constant dense<0.000000e+00> : vector<16x8xf32>
    %62 = tpu.matmul %3, %61, %cst_61 {dimension_numbers = #tpu.dot_dimension_numbers<[1], [0], [0], [1], [0, 0, 1, 1], [], []>} : vector<16x32xf32>, vector<32x8xf32>, vector<16x8xf32> -> vector<16x8xf32>
    %63 = arith.addf %59, %62 : vector<16x8xf32>
    %c6_62 = arith.constant 6 : index
    %c0_63 = arith.constant 0 : index
    %c0_64 = arith.constant 0 : index
    %64 = vector.load %arg6[%c6_62, %c0_63, %c0_64] : memref<12x16x8xf32, #tpu.memory_space<vmem>>, vector<1x16x8xf32>
    %65 = vector.shape_cast %64 : vector<1x16x8xf32> to vector<16x8xf32>
    %66 = vector.shape_cast %63 : vector<16x8xf32> to vector<1x16x8xf32>
    tpu.vector_store %arg6[%c6_62, %c0_63, %c0_64], %66 {strides = array<i32>} : memref<12x16x8xf32, #tpu.memory_space<vmem>>, vector<1x16x8xf32>,
    %c7 = arith.constant 7 : index
    %c0_65 = arith.constant 0 : index
    %c0_66 = arith.constant 0 : index
    %67 = vector.load %arg6[%c7, %c0_65, %c0_66] : memref<12x16x8xf32, #tpu.memory_space<vmem>>, vector<1x16x8xf32>
    %68 = vector.shape_cast %67 : vector<1x16x8xf32> to vector<16x8xf32>
    %c7_67 = arith.constant 7 : index
    %c0_68 = arith.constant 0 : index
    %c0_69 = arith.constant 0 : index
    %69 = vector.load %arg4[%c7_67, %c0_68, %c0_69] : memref<12x32x8xf32, #tpu.memory_space<vmem>>, vector<1x32x8xf32>
    %70 = vector.shape_cast %69 : vector<1x32x8xf32> to vector<32x8xf32>
    %cst_70 = arith.constant dense<0.000000e+00> : vector<16x8xf32>
    %71 = tpu.matmul %3, %70, %cst_70 {dimension_numbers = #tpu.dot_dimension_numbers<[1], [0], [0], [1], [0, 0, 1, 1], [], []>} : vector<16x32xf32>, vector<32x8xf32>, vector<16x8xf32> -> vector<16x8xf32>
    %72 = arith.addf %68, %71 : vector<16x8xf32>
    %c7_71 = arith.constant 7 : index
    %c0_72 = arith.constant 0 : index
    %c0_73 = arith.constant 0 : index
    %73 = vector.load %arg6[%c7_71, %c0_72, %c0_73] : memref<12x16x8xf32, #tpu.memory_space<vmem>>, vector<1x16x8xf32>
    %74 = vector.shape_cast %73 : vector<1x16x8xf32> to vector<16x8xf32>
    %75 = vector.shape_cast %72 : vector<16x8xf32> to vector<1x16x8xf32>
    tpu.vector_store %arg6[%c7_71, %c0_72, %c0_73], %75 {strides = array<i32>} : memref<12x16x8xf32, #tpu.memory_space<vmem>>, vector<1x16x8xf32>,
    %c8 = arith.constant 8 : index
    %c0_74 = arith.constant 0 : index
    %c0_75 = arith.constant 0 : index
    %76 = vector.load %arg6[%c8, %c0_74, %c0_75] : memref<12x16x8xf32, #tpu.memory_space<vmem>>, vector<1x16x8xf32>
    %77 = vector.shape_cast %76 : vector<1x16x8xf32> to vector<16x8xf32>
    %c8_76 = arith.constant 8 : index
    %c0_77 = arith.constant 0 : index
    %c0_78 = arith.constant 0 : index
    %78 = vector.load %arg4[%c8_76, %c0_77, %c0_78] : memref<12x32x8xf32, #tpu.memory_space<vmem>>, vector<1x32x8xf32>
    %79 = vector.shape_cast %78 : vector<1x32x8xf32> to vector<32x8xf32>
    %cst_79 = arith.constant dense<0.000000e+00> : vector<16x8xf32>
    %80 = tpu.matmul %3, %79, %cst_79 {dimension_numbers = #tpu.dot_dimension_numbers<[1], [0], [0], [1], [0, 0, 1, 1], [], []>} : vector<16x32xf32>, vector<32x8xf32>, vector<16x8xf32> -> vector<16x8xf32>
    %81 = arith.addf %77, %80 : vector<16x8xf32>
    %c8_80 = arith.constant 8 : index
    %c0_81 = arith.constant 0 : index
    %c0_82 = arith.constant 0 : index
    %82 = vector.load %arg6[%c8_80, %c0_81, %c0_82] : memref<12x16x8xf32, #tpu.memory_space<vmem>>, vector<1x16x8xf32>
    %83 = vector.shape_cast %82 : vector<1x16x8xf32> to vector<16x8xf32>
    %84 = vector.shape_cast %81 : vector<16x8xf32> to vector<1x16x8xf32>
    tpu.vector_store %arg6[%c8_80, %c0_81, %c0_82], %84 {strides = array<i32>} : memref<12x16x8xf32, #tpu.memory_space<vmem>>, vector<1x16x8xf32>,
    %c9 = arith.constant 9 : index
    %c0_83 = arith.constant 0 : index
    %c0_84 = arith.constant 0 : index
    %85 = vector.load %arg6[%c9, %c0_83, %c0_84] : memref<12x16x8xf32, #tpu.memory_space<vmem>>, vector<1x16x8xf32>
    %86 = vector.shape_cast %85 : vector<1x16x8xf32> to vector<16x8xf32>
    %c9_85 = arith.constant 9 : index
    %c0_86 = arith.constant 0 : index
    %c0_87 = arith.constant 0 : index
    %87 = vector.load %arg4[%c9_85, %c0_86, %c0_87] : memref<12x32x8xf32, #tpu.memory_space<vmem>>, vector<1x32x8xf32>
    %88 = vector.shape_cast %87 : vector<1x32x8xf32> to vector<32x8xf32>
    %cst_88 = arith.constant dense<0.000000e+00> : vector<16x8xf32>
    %89 = tpu.matmul %3, %88, %cst_88 {dimension_numbers = #tpu.dot_dimension_numbers<[1], [0], [0], [1], [0, 0, 1, 1], [], []>} : vector<16x32xf32>, vector<32x8xf32>, vector<16x8xf32> -> vector<16x8xf32>
    %90 = arith.addf %86, %89 : vector<16x8xf32>
    %c9_89 = arith.constant 9 : index
    %c0_90 = arith.constant 0 : index
    %c0_91 = arith.constant 0 : index
    %91 = vector.load %arg6[%c9_89, %c0_90, %c0_91] : memref<12x16x8xf32, #tpu.memory_space<vmem>>, vector<1x16x8xf32>
    %92 = vector.shape_cast %91 : vector<1x16x8xf32> to vector<16x8xf32>
    %93 = vector.shape_cast %90 : vector<16x8xf32> to vector<1x16x8xf32>
    tpu.vector_store %arg6[%c9_89, %c0_90, %c0_91], %93 {strides = array<i32>} : memref<12x16x8xf32, #tpu.memory_space<vmem>>, vector<1x16x8xf32>,
    %c10 = arith.constant 10 : index
    %c0_92 = arith.constant 0 : index
    %c0_93 = arith.constant 0 : index
    %94 = vector.load %arg6[%c10, %c0_92, %c0_93] : memref<12x16x8xf32, #tpu.memory_space<vmem>>, vector<1x16x8xf32>
    %95 = vector.shape_cast %94 : vector<1x16x8xf32> to vector<16x8xf32>
    %c10_94 = arith.constant 10 : index
    %c0_95 = arith.constant 0 : index
    %c0_96 = arith.constant 0 : index
    %96 = vector.load %arg4[%c10_94, %c0_95, %c0_96] : memref<12x32x8xf32, #tpu.memory_space<vmem>>, vector<1x32x8xf32>
    %97 = vector.shape_cast %96 : vector<1x32x8xf32> to vector<32x8xf32>
    %cst_97 = arith.constant dense<0.000000e+00> : vector<16x8xf32>
    %98 = tpu.matmul %3, %97, %cst_97 {dimension_numbers = #tpu.dot_dimension_numbers<[1], [0], [0], [1], [0, 0, 1, 1], [], []>} : vector<16x32xf32>, vector<32x8xf32>, vector<16x8xf32> -> vector<16x8xf32>
    %99 = arith.addf %95, %98 : vector<16x8xf32>
    %c10_98 = arith.constant 10 : index
    %c0_99 = arith.constant 0 : index
    %c0_100 = arith.constant 0 : index
    %100 = vector.load %arg6[%c10_98, %c0_99, %c0_100] : memref<12x16x8xf32, #tpu.memory_space<vmem>>, vector<1x16x8xf32>
    %101 = vector.shape_cast %100 : vector<1x16x8xf32> to vector<16x8xf32>
    %102 = vector.shape_cast %99 : vector<16x8xf32> to vector<1x16x8xf32>
    tpu.vector_store %arg6[%c10_98, %c0_99, %c0_100], %102 {strides = array<i32>} : memref<12x16x8xf32, #tpu.memory_space<vmem>>, vector<1x16x8xf32>,
    %c11 = arith.constant 11 : index
    %c0_101 = arith.constant 0 : index
    %c0_102 = arith.constant 0 : index
    %103 = vector.load %arg6[%c11, %c0_101, %c0_102] : memref<12x16x8xf32, #tpu.memory_space<vmem>>, vector<1x16x8xf32>
    %104 = vector.shape_cast %103 : vector<1x16x8xf32> to vector<16x8xf32>
    %c11_103 = arith.constant 11 : index
    %c0_104 = arith.constant 0 : index
    %c0_105 = arith.constant 0 : index
    %105 = vector.load %arg4[%c11_103, %c0_104, %c0_105] : memref<12x32x8xf32, #tpu.memory_space<vmem>>, vector<1x32x8xf32>
    %106 = vector.shape_cast %105 : vector<1x32x8xf32> to vector<32x8xf32>
    %cst_106 = arith.constant dense<0.000000e+00> : vector<16x8xf32>
    %107 = tpu.matmul %3, %106, %cst_106 {dimension_numbers = #tpu.dot_dimension_numbers<[1], [0], [0], [1], [0, 0, 1, 1], [], []>} : vector<16x32xf32>, vector<32x8xf32>, vector<16x8xf32> -> vector<16x8xf32>
    %108 = arith.addf %104, %107 : vector<16x8xf32>
    %c11_107 = arith.constant 11 : index
    %c0_108 = arith.constant 0 : index
    %c0_109 = arith.constant 0 : index
    %109 = vector.load %arg6[%c11_107, %c0_108, %c0_109] : memref<12x16x8xf32, #tpu.memory_space<vmem>>, vector<1x16x8xf32>
    %110 = vector.shape_cast %109 : vector<1x16x8xf32> to vector<16x8xf32>
    %111 = vector.shape_cast %108 : vector<16x8xf32> to vector<1x16x8xf32>
    tpu.vector_store %arg6[%c11_107, %c0_108, %c0_109], %111 {strides = array<i32>} : memref<12x16x8xf32, #tpu.memory_space<vmem>>, vector<1x16x8xf32>,
    %c0_i32_110 = arith.constant 0 : i32
    %112 = arith.cmpi eq, %arg2, %c0_i32_110 : i32
    %113 = arith.extui %112 : i1 to i32
    %c0_i32_111 = arith.constant 0 : i32
    %114 = arith.cmpi ne, %113, %c0_i32_111 : i32
    scf.if %114 {
      %c0_112 = arith.constant 0 : index
      %c0_113 = arith.constant 0 : index
      %c0_114 = arith.constant 0 : index
      %115 = vector.load %arg6[%c0_112, %c0_113, %c0_114] : memref<12x16x8xf32, #tpu.memory_space<vmem>>, vector<12x16x8xf32>
      %c0_115 = arith.constant 0 : index
      %c0_116 = arith.constant 0 : index
      %c0_117 = arith.constant 0 : index
      %116 = vector.load %arg5[%c0_115, %c0_116, %c0_117] : memref<12x16x8xf32, #tpu.memory_space<vmem>>, vector<12x16x8xf32>
      tpu.vector_store %arg5[%c0_115, %c0_116, %c0_117], %115 {strides = array<i32>} : memref<12x16x8xf32, #tpu.memory_space<vmem>>, vector<12x16x8xf32>,
    } else {
    }
    return
  }
  func.func @transform_0(%arg0: i32, %arg1: i32, %arg2: i32) -> (i32, i32) {
    %c0_i32 = arith.constant 0 : i32
    return %arg0, %arg2 : i32, i32
  }
  func.func @transform_1(%arg0: i32, %arg1: i32, %arg2: i32) -> (i32, i32, i32) {
    %c0_i32 = arith.constant 0 : i32
    %c0_i32_0 = arith.constant 0 : i32
    return %arg1, %arg2, %c0_i32 : i32, i32, i32
  }
  func.func @transform_2(%arg0: i32, %arg1: i32, %arg2: i32) -> (i32, i32, i32) {
    %c0_i32 = arith.constant 0 : i32
    %c0_i32_0 = arith.constant 0 : i32
    return %arg1, %arg0, %c0_i32 : i32, i32, i32
  }
}

</mosaic_0001>

<llo_original>
// kernel: tpu_custom_call.1
$region0: #{tpu_custom_call.1}
  #allocation0 [shape = 'u32[]', space=smem, size = 0x4, offset = 0x4, fixed_abs, tag = 'smem constant byte address 0x4 - core index']
  #allocation1 [shape = 'u32[72,128]{1,0:T(1,128)}', space=vmem, size = 0x9000, scoped, tag = 'internal scratch']
  #allocation2 [shape = 'f32[12,16,8]{2,1,0:T(8,128)}', space=vmem, size = 0x18000, scoped, tag = 'scratch operand']
  %s0 = inlined_call_operand.vmem [shape: f32[16,32], index: 0, kind: input, shape index: {}]
  %s1 = inlined_call_operand.vmem [shape: f32[12,32,8], index: 1, kind: input, shape index: {}]
  %s2 = inlined_call_operand.vmem [shape: f32[12,16,8], index: 2, kind: output, shape index: {}]
  %s3 = sld [smem:[#allocation0]]
  $region26: #{tpu_custom_call.1} parent=0
    _
  %s5 = ssub.s32 1, %s3
  %s6 = scalar_select 0, %s5, %s3
  // Predicated region
  $region2: #{tpu_custom_call.1} parent=0 // pred_check
    _
  $region3: #{tpu_custom_call.1} parent=0 // pred_check_branch
    %8 = sbr.rel (0) target = $region5
  $region4: #{tpu_custom_call.1} parent=0 // pred_region
    _
  $region5: #{tpu_custom_call.1} parent=0 // pred_fallthru
    _
  // Predicated region
  $region6: #{tpu_custom_call.1} parent=0 // pred_check
    _
  $region7: #{tpu_custom_call.1} parent=0 // pred_check_branch
    %10 = sbr.rel (0) target = $region9
  $region8: #{tpu_custom_call.1} parent=0 // pred_region
    _
  $region9: #{tpu_custom_call.1} parent=0 // pred_fallthru
    _
  %p11 = scmp.eq.s32.totalorder 0, 0
  // Predicated region
  $region10: #{tpu_custom_call.1} parent=0 // pred_check
    %p12 = pneg %p11
  $region11: #{tpu_custom_call.1} parent=0 // pred_check_branch
    %14 = sbr.rel (%p12) target = $region13
  $region12: #{tpu_custom_call.1} parent=0 // pred_region
    %vm15 = vcmask 64512
    %16 = vst.msk [vmem:[#allocation2] sm:$0xff] %vm15, 0.0
    %17 = vst.msk [vmem:[#allocation2 + $0x8] sm:$0xff] %vm15, 0.0
    %18 = vst.msk [vmem:[#allocation2 + $0x10] sm:$0xff] %vm15, 0.0
    %19 = vst.msk [vmem:[#allocation2 + $0x18] sm:$0xff] %vm15, 0.0
    %20 = vst.msk [vmem:[#allocation2 + $0x20] sm:$0xff] %vm15, 0.0
    %21 = vst.msk [vmem:[#allocation2 + $0x28] sm:$0xff] %vm15, 0.0
    %22 = vst.msk [vmem:[#allocation2 + $0x30] sm:$0xff] %vm15, 0.0
    %23 = vst.msk [vmem:[#allocation2 + $0x38] sm:$0xff] %vm15, 0.0
    %24 = vst.msk [vmem:[#allocation2 + $0x40] sm:$0xff] %vm15, 0.0
    %25 = vst.msk [vmem:[#allocation2 + $0x48] sm:$0xff] %vm15, 0.0
    %26 = vst.msk [vmem:[#allocation2 + $0x50] sm:$0xff] %vm15, 0.0
    %27 = vst.msk [vmem:[#allocation2 + $0x58] sm:$0xff] %vm15, 0.0
    %28 = vst.msk [vmem:[#allocation2 + $0x60] sm:$0xff] %vm15, 0.0
    %29 = vst.msk [vmem:[#allocation2 + $0x68] sm:$0xff] %vm15, 0.0
    %30 = vst.msk [vmem:[#allocation2 + $0x70] sm:$0xff] %vm15, 0.0
    %31 = vst.msk [vmem:[#allocation2 + $0x78] sm:$0xff] %vm15, 0.0
    %32 = vst.msk [vmem:[#allocation2 + $0x80] sm:$0xff] %vm15, 0.0
    %33 = vst.msk [vmem:[#allocation2 + $0x88] sm:$0xff] %vm15, 0.0
    %34 = vst.msk [vmem:[#allocation2 + $0x90] sm:$0xff] %vm15, 0.0
    %35 = vst.msk [vmem:[#allocation2 + $0x98] sm:$0xff] %vm15, 0.0
    %36 = vst.msk [vmem:[#allocation2 + $0xa0] sm:$0xff] %vm15, 0.0
    %37 = vst.msk [vmem:[#allocation2 + $0xa8] sm:$0xff] %vm15, 0.0
    %38 = vst.msk [vmem:[#allocation2 + $0xb0] sm:$0xff] %vm15, 0.0
    %39 = vst.msk [vmem:[#allocation2 + $0xb8] sm:$0xff] %vm15, 0.0
  $region13: #{tpu_custom_call.1} parent=0 // pred_fallthru
    _
  %v40 = vld [vmem:[%s0] sm:$0xff]
  %v41 = vld [vmem:[%s0 + $0x8] sm:$0xff]
  %v42 = vld [vmem:[#allocation2] sm:$0xff]
  %v43 = vld [vmem:[#allocation2 + $0x8] sm:$0xff]
  %v44 = vld [vmem:[%s1] sm:$0xff]
  %v45 = vld [vmem:[%s1 + $0x8] sm:$0xff]
  %v46 = vld [vmem:[%s1 + $0x10] sm:$0xff]
  %v47 = vld [vmem:[%s1 + $0x18] sm:$0xff]
  %vm48 = vcmask 261120
  %v50 = vsel %vm48, %v40, 0
  %v53 = vsel %vm48, %v41, 0
  %55 = vmatpush.msra.mxu0 0.0
  %56 = vmatpush.msra.mxu0 0.0
  %57 = vmatpush.msra.mxu0 0.0
  %58 = vmatpush.msra.mxu0 0.0
  %59 = vmatpush.msra.mxu0 0.0
  %60 = vmatpush.msra.mxu0 0.0
  %61 = vmatpush.msra.mxu0 0.0
  %62 = vmatpush.msra.mxu0 0.0
  %63 = vmatpush.msra.mxu0 0.0
  %64 = vmatpush.msra.mxu0 0.0
  %65 = vmatpush.msra.mxu0 0.0
  %66 = vmatpush.msra.mxu0 0.0
  %67 = vmatpush.msra.mxu0 %v47
  %68 = vmatpush.msra.mxu0 %v46
  %69 = vmatpush.msra.mxu0 %v45
  %70 = vmatpush.msra.mxu0 %v44
  %71 = vmatmul.f32.gmra.mxu0 %v50
  %v72 = vpop.f32.mrf.mxu0
  %v73 = vadd.f32 0.0, %v72
  %74 = vmatmul.f32.gmra.mxu0 %v53
  %v75 = vpop.f32.mrf.mxu0
  %v76 = vadd.f32 0.0, %v75
  %77 = vdwg.mxu0
  %v78 = vadd.f32 %v42, %v73
  %v79 = vadd.f32 %v43, %v76
  %vm80 = vcmask 64512
  %81 = vst.msk [vmem:[#allocation2] sm:$0xff] %vm80, %v78
  %82 = vst.msk [vmem:[#allocation2 + $0x8] sm:$0xff] %vm80, %v79
  %s83 = scalar_lea.vmem [#allocation2], 16
  %v84 = vld [vmem:[%s83] sm:$0xff]
  %v85 = vld [vmem:[%s83 + $0x8] sm:$0xff]
  %s86 = scalar_lea.vmem %s1, 32
  %v87 = vld [vmem:[%s86] sm:$0xff]
  %v88 = vld [vmem:[%s86 + $0x8] sm:$0xff]
  %v89 = vld [vmem:[%s86 + $0x10] sm:$0xff]
  %v90 = vld [vmem:[%s86 + $0x18] sm:$0xff]
  %91 = vmatpush.msra.mxu0 0.0
  %92 = vmatpush.msra.mxu0 0.0
  %93 = vmatpush.msra.mxu0 0.0
  %94 = vmatpush.msra.mxu0 0.0
  %95 = vmatpush.msra.mxu0 0.0
  %96 = vmatpush.msra.mxu0 0.0
  %97 = vmatpush.msra.mxu0 0.0
  %98 = vmatpush.msra.mxu0 0.0
  %99 = vmatpush.msra.mxu0 0.0
  %100 = vmatpush.msra.mxu0 0.0
  %101 = vmatpush.msra.mxu0 0.0
  %102 = vmatpush.msra.mxu0 0.0
  %103 = vmatpush.msra.mxu0 %v90
  %104 = vmatpush.msra.mxu0 %v89
  %105 = vmatpush.msra.mxu0 %v88
  %106 = vmatpush.msra.mxu0 %v87
  %107 = vmatmul.f32.gmra.mxu0 %v50
  %v108 = vpop.f32.mrf.mxu0
  %v109 = vadd.f32 0.0, %v108
  %110 = vmatmul.f32.gmra.mxu0 %v53
  %v111 = vpop.f32.mrf.mxu0
  %v112 = vadd.f32 0.0, %v111
  %113 = vdwg.mxu0
  %v114 = vadd.f32 %v84, %v109
  %v115 = vadd.f32 %v85, %v112
  %116 = vst.msk [vmem:[%s83] sm:$0xff] %vm80, %v114
  %117 = vst.msk [vmem:[%s83 + $0x8] sm:$0xff] %vm80, %v115
  %s118 = scalar_lea.vmem [#allocation2], 32
  %v119 = vld [vmem:[%s118] sm:$0xff]
  %v120 = vld [vmem:[%s118 + $0x8] sm:$0xff]
  %s121 = scalar_lea.vmem %s1, 64
  %v122 = vld [vmem:[%s121] sm:$0xff]
  %v123 = vld [vmem:[%s121 + $0x8] sm:$0xff]
  %v124 = vld [vmem:[%s121 + $0x10] sm:$0xff]
  %v125 = vld [vmem:[%s121 + $0x18] sm:$0xff]
  %126 = vmatpush.msra.mxu0 0.0
  %127 = vmatpush.msra.mxu0 0.0
  %128 = vmatpush.msra.mxu0 0.0
  %129 = vmatpush.msra.mxu0 0.0
  %130 = vmatpush.msra.mxu0 0.0
  %131 = vmatpush.msra.mxu0 0.0
  %132 = vmatpush.msra.mxu0 0.0
  %133 = vmatpush.msra.mxu0 0.0
  %134 = vmatpush.msra.mxu0 0.0
  %135 = vmatpush.msra.mxu0 0.0
  %136 = vmatpush.msra.mxu0 0.0
  %137 = vmatpush.msra.mxu0 0.0
  %138 = vmatpush.msra.mxu0 %v125
  %139 = vmatpush.msra.mxu0 %v124
  %140 = vmatpush.msra.mxu0 %v123
  %141 = vmatpush.msra.mxu0 %v122
  %142 = vmatmul.f32.gmra.mxu0 %v50
  %v143 = vpop.f32.mrf.mxu0
  %v144 = vadd.f32 0.0, %v143
  %145 = vmatmul.f32.gmra.mxu0 %v53
  %v146 = vpop.f32.mrf.mxu0
  %v147 = vadd.f32 0.0, %v146
  %148 = vdwg.mxu0
  %v149 = vadd.f32 %v119, %v144
  %v150 = vadd.f32 %v120, %v147
  %151 = vst.msk [vmem:[%s118] sm:$0xff] %vm80, %v149
  %152 = vst.msk [vmem:[%s118 + $0x8] sm:$0xff] %vm80, %v150
  %s153 = scalar_lea.vmem [#allocation2], 48
  %v154 = vld [vmem:[%s153] sm:$0xff]
  %v155 = vld [vmem:[%s153 + $0x8] sm:$0xff]
  %s156 = scalar_lea.vmem %s1, 96
  %v157 = vld [vmem:[%s156] sm:$0xff]
  %v158 = vld [vmem:[%s156 + $0x8] sm:$0xff]
  %v159 = vld [vmem:[%s156 + $0x10] sm:$0xff]
  %v160 = vld [vmem:[%s156 + $0x18] sm:$0xff]
  %161 = vmatpush.msra.mxu0 0.0
  %162 = vmatpush.msra.mxu0 0.0
  %163 = vmatpush.msra.mxu0 0.0
  %164 = vmatpush.msra.mxu0 0.0
  %165 = vmatpush.msra.mxu0 0.0
  %166 = vmatpush.msra.mxu0 0.0
  %167 = vmatpush.msra.mxu0 0.0
  %168 = vmatpush.msra.mxu0 0.0
  %169 = vmatpush.msra.mxu0 0.0
  %170 = vmatpush.msra.mxu0 0.0
  %171 = vmatpush.msra.mxu0 0.0
  %172 = vmatpush.msra.mxu0 0.0
  %173 = vmatpush.msra.mxu0 %v160
  %174 = vmatpush.msra.mxu0 %v159
  %175 = vmatpush.msra.mxu0 %v158
  %176 = vmatpush.msra.mxu0 %v157
  %177 = vmatmul.f32.gmra.mxu0 %v50
  %v178 = vpop.f32.mrf.mxu0
  %v179 = vadd.f32 0.0, %v178
  %180 = vmatmul.f32.gmra.mxu0 %v53
  %v181 = vpop.f32.mrf.mxu0
  %v182 = vadd.f32 0.0, %v181
  %183 = vdwg.mxu0
  %v184 = vadd.f32 %v154, %v179
  %v185 = vadd.f32 %v155, %v182
  %186 = vst.msk [vmem:[%s153] sm:$0xff] %vm80, %v184
  %187 = vst.msk [vmem:[%s153 + $0x8] sm:$0xff] %vm80, %v185
  %s188 = scalar_lea.vmem [#allocation2], 64
  %v189 = vld [vmem:[%s188] sm:$0xff]
  %v190 = vld [vmem:[%s188 + $0x8] sm:$0xff]
  %s191 = scalar_lea.vmem %s1, 128
  %v192 = vld [vmem:[%s191] sm:$0xff]
  %v193 = vld [vmem:[%s191 + $0x8] sm:$0xff]
  %v194 = vld [vmem:[%s191 + $0x10] sm:$0xff]
  %v195 = vld [vmem:[%s191 + $0x18] sm:$0xff]
  %196 = vmatpush.msra.mxu0 0.0
  %197 = vmatpush.msra.mxu0 0.0
  %198 = vmatpush.msra.mxu0 0.0
  %199 = vmatpush.msra.mxu0 0.0
  %200 = vmatpush.msra.mxu0 0.0
  %201 = vmatpush.msra.mxu0 0.0
  %202 = vmatpush.msra.mxu0 0.0
  %203 = vmatpush.msra.mxu0 0.0
  %204 = vmatpush.msra.mxu0 0.0
  %205 = vmatpush.msra.mxu0 0.0
  %206 = vmatpush.msra.mxu0 0.0
  %207 = vmatpush.msra.mxu0 0.0
  %208 = vmatpush.msra.mxu0 %v195
  %209 = vmatpush.msra.mxu0 %v194
  %210 = vmatpush.msra.mxu0 %v193
  %211 = vmatpush.msra.mxu0 %v192
  %212 = vmatmul.f32.gmra.mxu0 %v50
  %v213 = vpop.f32.mrf.mxu0
  %v214 = vadd.f32 0.0, %v213
  %215 = vmatmul.f32.gmra.mxu0 %v53
  %v216 = vpop.f32.mrf.mxu0
  %v217 = vadd.f32 0.0, %v216
  %218 = vdwg.mxu0
  %v219 = vadd.f32 %v189, %v214
  %v220 = vadd.f32 %v190, %v217
  %221 = vst.msk [vmem:[%s188] sm:$0xff] %vm80, %v219
  %222 = vst.msk [vmem:[%s188 + $0x8] sm:$0xff] %vm80, %v220
  %s223 = scalar_lea.vmem [#allocation2], 80
  %v224 = vld [vmem:[%s223] sm:$0xff]
  %v225 = vld [vmem:[%s223 + $0x8] sm:$0xff]
  %s226 = scalar_lea.vmem %s1, 160
  %v227 = vld [vmem:[%s226] sm:$0xff]
  %v228 = vld [vmem:[%s226 + $0x8] sm:$0xff]
  %v229 = vld [vmem:[%s226 + $0x10] sm:$0xff]
  %v230 = vld [vmem:[%s226 + $0x18] sm:$0xff]
  %231 = vmatpush.msra.mxu0 0.0
  %232 = vmatpush.msra.mxu0 0.0
  %233 = vmatpush.msra.mxu0 0.0
  %234 = vmatpush.msra.mxu0 0.0
  %235 = vmatpush.msra.mxu0 0.0
  %236 = vmatpush.msra.mxu0 0.0
  %237 = vmatpush.msra.mxu0 0.0
  %238 = vmatpush.msra.mxu0 0.0
  %239 = vmatpush.msra.mxu0 0.0
  %240 = vmatpush.msra.mxu0 0.0
  %241 = vmatpush.msra.mxu0 0.0
  %242 = vmatpush.msra.mxu0 0.0
  %243 = vmatpush.msra.mxu0 %v230
  %244 = vmatpush.msra.mxu0 %v229
  %245 = vmatpush.msra.mxu0 %v228
  %246 = vmatpush.msra.mxu0 %v227
  %247 = vmatmul.f32.gmra.mxu0 %v50
  %v248 = vpop.f32.mrf.mxu0
  %v249 = vadd.f32 0.0, %v248
  %250 = vmatmul.f32.gmra.mxu0 %v53
  %v251 = vpop.f32.mrf.mxu0
  %v252 = vadd.f32 0.0, %v251
  %253 = vdwg.mxu0
  %v254 = vadd.f32 %v224, %v249
  %v255 = vadd.f32 %v225, %v252
  %256 = vst.msk [vmem:[%s223] sm:$0xff] %vm80, %v254
  %257 = vst.msk [vmem:[%s223 + $0x8] sm:$0xff] %vm80, %v255
  %s258 = scalar_lea.vmem [#allocation2], 96
  %v259 = vld [vmem:[%s258] sm:$0xff]
  %v260 = vld [vmem:[%s258 + $0x8] sm:$0xff]
  %s261 = scalar_lea.vmem %s1, 192
  %v262 = vld [vmem:[%s261] sm:$0xff]
  %v263 = vld [vmem:[%s261 + $0x8] sm:$0xff]
  %v264 = vld [vmem:[%s261 + $0x10] sm:$0xff]
  %v265 = vld [vmem:[%s261 + $0x18] sm:$0xff]
  %266 = vmatpush.msra.mxu0 0.0
  %267 = vmatpush.msra.mxu0 0.0
  %268 = vmatpush.msra.mxu0 0.0
  %269 = vmatpush.msra.mxu0 0.0
  %270 = vmatpush.msra.mxu0 0.0
  %271 = vmatpush.msra.mxu0 0.0
  %272 = vmatpush.msra.mxu0 0.0
  %273 = vmatpush.msra.mxu0 0.0
  %274 = vmatpush.msra.mxu0 0.0
  %275 = vmatpush.msra.mxu0 0.0
  %276 = vmatpush.msra.mxu0 0.0
  %277 = vmatpush.msra.mxu0 0.0
  %278 = vmatpush.msra.mxu0 %v265
  %279 = vmatpush.msra.mxu0 %v264
  %280 = vmatpush.msra.mxu0 %v263
  %281 = vmatpush.msra.mxu0 %v262
  %282 = vmatmul.f32.gmra.mxu0 %v50
  %v283 = vpop.f32.mrf.mxu0
  %v284 = vadd.f32 0.0, %v283
  %285 = vmatmul.f32.gmra.mxu0 %v53
  %v286 = vpop.f32.mrf.mxu0
  %v287 = vadd.f32 0.0, %v286
  %288 = vdwg.mxu0
  %v289 = vadd.f32 %v259, %v284
  %v290 = vadd.f32 %v260, %v287
  %291 = vst.msk [vmem:[%s258] sm:$0xff] %vm80, %v289
  %292 = vst.msk [vmem:[%s258 + $0x8] sm:$0xff] %vm80, %v290
  %s293 = scalar_lea.vmem [#allocation2], 112
  %v294 = vld [vmem:[%s293] sm:$0xff]
  %v295 = vld [vmem:[%s293 + $0x8] sm:$0xff]
  %s296 = scalar_lea.vmem %s1, 224
  %v297 = vld [vmem:[%s296] sm:$0xff]
  %v298 = vld [vmem:[%s296 + $0x8] sm:$0xff]
  %v299 = vld [vmem:[%s296 + $0x10] sm:$0xff]
  %v300 = vld [vmem:[%s296 + $0x18] sm:$0xff]
  %301 = vmatpush.msra.mxu0 0.0
  %302 = vmatpush.msra.mxu0 0.0
  %303 = vmatpush.msra.mxu0 0.0
  %304 = vmatpush.msra.mxu0 0.0
  %305 = vmatpush.msra.mxu0 0.0
  %306 = vmatpush.msra.mxu0 0.0
  %307 = vmatpush.msra.mxu0 0.0
  %308 = vmatpush.msra.mxu0 0.0
  %309 = vmatpush.msra.mxu0 0.0
  %310 = vmatpush.msra.mxu0 0.0
  %311 = vmatpush.msra.mxu0 0.0
  %312 = vmatpush.msra.mxu0 0.0
  %313 = vmatpush.msra.mxu0 %v300
  %314 = vmatpush.msra.mxu0 %v299
  %315 = vmatpush.msra.mxu0 %v298
  %316 = vmatpush.msra.mxu0 %v297
  %317 = vmatmul.f32.gmra.mxu0 %v50
  %v318 = vpop.f32.mrf.mxu0
  %v319 = vadd.f32 0.0, %v318
  %320 = vmatmul.f32.gmra.mxu0 %v53
  %v321 = vpop.f32.mrf.mxu0
  %v322 = vadd.f32 0.0, %v321
  %323 = vdwg.mxu0
  %v324 = vadd.f32 %v294, %v319
  %v325 = vadd.f32 %v295, %v322
  %326 = vst.msk [vmem:[%s293] sm:$0xff] %vm80, %v324
  %327 = vst.msk [vmem:[%s293 + $0x8] sm:$0xff] %vm80, %v325
  %s328 = scalar_lea.vmem [#allocation2], 128
  %v329 = vld [vmem:[%s328] sm:$0xff]
  %v330 = vld [vmem:[%s328 + $0x8] sm:$0xff]
  %s331 = scalar_lea.vmem %s1, 256
  %v332 = vld [vmem:[%s331] sm:$0xff]
  %v333 = vld [vmem:[%s331 + $0x8] sm:$0xff]
  %v334 = vld [vmem:[%s331 + $0x10] sm:$0xff]
  %v335 = vld [vmem:[%s331 + $0x18] sm:$0xff]
  %336 = vmatpush.msra.mxu0 0.0
  %337 = vmatpush.msra.mxu0 0.0
  %338 = vmatpush.msra.mxu0 0.0
  %339 = vmatpush.msra.mxu0 0.0
  %340 = vmatpush.msra.mxu0 0.0
  %341 = vmatpush.msra.mxu0 0.0
  %342 = vmatpush.msra.mxu0 0.0
  %343 = vmatpush.msra.mxu0 0.0
  %344 = vmatpush.msra.mxu0 0.0
  %345 = vmatpush.msra.mxu0 0.0
  %346 = vmatpush.msra.mxu0 0.0
  %347 = vmatpush.msra.mxu0 0.0
  %348 = vmatpush.msra.mxu0 %v335
  %349 = vmatpush.msra.mxu0 %v334
  %350 = vmatpush.msra.mxu0 %v333
  %351 = vmatpush.msra.mxu0 %v332
  %352 = vmatmul.f32.gmra.mxu0 %v50
  %v353 = vpop.f32.mrf.mxu0
  %v354 = vadd.f32 0.0, %v353
  %355 = vmatmul.f32.gmra.mxu0 %v53
  %v356 = vpop.f32.mrf.mxu0
  %v357 = vadd.f32 0.0, %v356
  %358 = vdwg.mxu0
  %v359 = vadd.f32 %v329, %v354
  %v360 = vadd.f32 %v330, %v357
  %361 = vst.msk [vmem:[%s328] sm:$0xff] %vm80, %v359
  %362 = vst.msk [vmem:[%s328 + $0x8] sm:$0xff] %vm80, %v360
  %s363 = scalar_lea.vmem [#allocation2], 144
  %v364 = vld [vmem:[%s363] sm:$0xff]
  %v365 = vld [vmem:[%s363 + $0x8] sm:$0xff]
  %s366 = scalar_lea.vmem %s1, 288
  %v367 = vld [vmem:[%s366] sm:$0xff]
  %v368 = vld [vmem:[%s366 + $0x8] sm:$0xff]
  %v369 = vld [vmem:[%s366 + $0x10] sm:$0xff]
  %v370 = vld [vmem:[%s366 + $0x18] sm:$0xff]
  %371 = vmatpush.msra.mxu0 0.0
  %372 = vmatpush.msra.mxu0 0.0
  %373 = vmatpush.msra.mxu0 0.0
  %374 = vmatpush.msra.mxu0 0.0
  %375 = vmatpush.msra.mxu0 0.0
  %376 = vmatpush.msra.mxu0 0.0
  %377 = vmatpush.msra.mxu0 0.0
  %378 = vmatpush.msra.mxu0 0.0
  %379 = vmatpush.msra.mxu0 0.0
  %380 = vmatpush.msra.mxu0 0.0
  %381 = vmatpush.msra.mxu0 0.0
  %382 = vmatpush.msra.mxu0 0.0
  %383 = vmatpush.msra.mxu0 %v370
  %384 = vmatpush.msra.mxu0 %v369
  %385 = vmatpush.msra.mxu0 %v368
  %386 = vmatpush.msra.mxu0 %v367
  %387 = vmatmul.f32.gmra.mxu0 %v50
  %v388 = vpop.f32.mrf.mxu0
  %v389 = vadd.f32 0.0, %v388
  %390 = vmatmul.f32.gmra.mxu0 %v53
  %v391 = vpop.f32.mrf.mxu0
  %v392 = vadd.f32 0.0, %v391
  %393 = vdwg.mxu0
  %v394 = vadd.f32 %v364, %v389
  %v395 = vadd.f32 %v365, %v392
  %396 = vst.msk [vmem:[%s363] sm:$0xff] %vm80, %v394
  %397 = vst.msk [vmem:[%s363 + $0x8] sm:$0xff] %vm80, %v395
  %s398 = scalar_lea.vmem [#allocation2], 160
  %v399 = vld [vmem:[%s398] sm:$0xff]
  %v400 = vld [vmem:[%s398 + $0x8] sm:$0xff]
  %s401 = scalar_lea.vmem %s1, 320
  %v402 = vld [vmem:[%s401] sm:$0xff]
  %v403 = vld [vmem:[%s401 + $0x8] sm:$0xff]
  %v404 = vld [vmem:[%s401 + $0x10] sm:$0xff]
  %v405 = vld [vmem:[%s401 + $0x18] sm:$0xff]
  %406 = vmatpush.msra.mxu0 0.0
  %407 = vmatpush.msra.mxu0 0.0
  %408 = vmatpush.msra.mxu0 0.0
  %409 = vmatpush.msra.mxu0 0.0
  %410 = vmatpush.msra.mxu0 0.0
  %411 = vmatpush.msra.mxu0 0.0
  %412 = vmatpush.msra.mxu0 0.0
  %413 = vmatpush.msra.mxu0 0.0
  %414 = vmatpush.msra.mxu0 0.0
  %415 = vmatpush.msra.mxu0 0.0
  %416 = vmatpush.msra.mxu0 0.0
  %417 = vmatpush.msra.mxu0 0.0
  %418 = vmatpush.msra.mxu0 %v405
  %419 = vmatpush.msra.mxu0 %v404
  %420 = vmatpush.msra.mxu0 %v403
  %421 = vmatpush.msra.mxu0 %v402
  %422 = vmatmul.f32.gmra.mxu0 %v50
  %v423 = vpop.f32.mrf.mxu0
  %v424 = vadd.f32 0.0, %v423
  %425 = vmatmul.f32.gmra.mxu0 %v53
  %v426 = vpop.f32.mrf.mxu0
  %v427 = vadd.f32 0.0, %v426
  %428 = vdwg.mxu0
  %v429 = vadd.f32 %v399, %v424
  %v430 = vadd.f32 %v400, %v427
  %431 = vst.msk [vmem:[%s398] sm:$0xff] %vm80, %v429
  %432 = vst.msk [vmem:[%s398 + $0x8] sm:$0xff] %vm80, %v430
  %s433 = scalar_lea.vmem [#allocation2], 176
  %v434 = vld [vmem:[%s433] sm:$0xff]
  %v435 = vld [vmem:[%s433 + $0x8] sm:$0xff]
  %s436 = scalar_lea.vmem %s1, 352
  %v437 = vld [vmem:[%s436] sm:$0xff]
  %v438 = vld [vmem:[%s436 + $0x8] sm:$0xff]
  %v439 = vld [vmem:[%s436 + $0x10] sm:$0xff]
  %v440 = vld [vmem:[%s436 + $0x18] sm:$0xff]
  %441 = vmatpush.msra.mxu0 0.0
  %442 = vmatpush.msra.mxu0 0.0
  %443 = vmatpush.msra.mxu0 0.0
  %444 = vmatpush.msra.mxu0 0.0
  %445 = vmatpush.msra.mxu0 0.0
  %446 = vmatpush.msra.mxu0 0.0
  %447 = vmatpush.msra.mxu0 0.0
  %448 = vmatpush.msra.mxu0 0.0
  %449 = vmatpush.msra.mxu0 0.0
  %450 = vmatpush.msra.mxu0 0.0
  %451 = vmatpush.msra.mxu0 0.0
  %452 = vmatpush.msra.mxu0 0.0
  %453 = vmatpush.msra.mxu0 %v440
  %454 = vmatpush.msra.mxu0 %v439
  %455 = vmatpush.msra.mxu0 %v438
  %456 = vmatpush.msra.mxu0 %v437
  %457 = vmatmul.f32.gmra.mxu0 %v50
  %v458 = vpop.f32.mrf.mxu0
  %v459 = vadd.f32 0.0, %v458
  %460 = vmatmul.f32.gmra.mxu0 %v53
  %v461 = vpop.f32.mrf.mxu0
  %v462 = vadd.f32 0.0, %v461
  %463 = vdwg.mxu0
  %v464 = vadd.f32 %v434, %v459
  %v465 = vadd.f32 %v435, %v462
  %466 = vst.msk [vmem:[%s433] sm:$0xff] %vm80, %v464
  %467 = vst.msk [vmem:[%s433 + $0x8] sm:$0xff] %vm80, %v465
  // Predicated region
  $region14: #{tpu_custom_call.1} parent=0 // pred_check
    %p468 = pneg %p11
  $region15: #{tpu_custom_call.1} parent=0 // pred_check_branch
    %470 = sbr.rel (%p468) target = $region17
  $region16: #{tpu_custom_call.1} parent=0 // pred_region
    %v471 = vld [vmem:[#allocation2] sm:$0xff]
    %v472 = vld [vmem:[#allocation2 + $0x8] sm:$0xff]
    %v473 = vld [vmem:[#allocation2 + $0x10] sm:$0xff]
    %v474 = vld [vmem:[#allocation2 + $0x18] sm:$0xff]
    %v475 = vld [vmem:[#allocation2 + $0x20] sm:$0xff]
    %v476 = vld [vmem:[#allocation2 + $0x28] sm:$0xff]
    %v477 = vld [vmem:[#allocation2 + $0x30] sm:$0xff]
    %v478 = vld [vmem:[#allocation2 + $0x38] sm:$0xff]
    %v479 = vld [vmem:[#allocation2 + $0x40] sm:$0xff]
    %v480 = vld [vmem:[#allocation2 + $0x48] sm:$0xff]
    %v481 = vld [vmem:[#allocation2 + $0x50] sm:$0xff]
    %v482 = vld [vmem:[#allocation2 + $0x58] sm:$0xff]
    %v483 = vld [vmem:[#allocation2 + $0x60] sm:$0xff]
    %v484 = vld [vmem:[#allocation2 + $0x68] sm:$0xff]
    %v485 = vld [vmem:[#allocation2 + $0x70] sm:$0xff]
    %v486 = vld [vmem:[#allocation2 + $0x78] sm:$0xff]
    %v487 = vld [vmem:[#allocation2 + $0x80] sm:$0xff]
    %v488 = vld [vmem:[#allocation2 + $0x88] sm:$0xff]
    %v489 = vld [vmem:[#allocation2 + $0x90] sm:$0xff]
    %v490 = vld [vmem:[#allocation2 + $0x98] sm:$0xff]
    %v491 = vld [vmem:[#allocation2 + $0xa0] sm:$0xff]
    %v492 = vld [vmem:[#allocation2 + $0xa8] sm:$0xff]
    %v493 = vld [vmem:[#allocation2 + $0xb0] sm:$0xff]
    %v494 = vld [vmem:[#allocation2 + $0xb8] sm:$0xff]
    %495 = vst.msk [vmem:[%s2] sm:$0xff] %vm80, %v471
    %496 = vst.msk [vmem:[%s2 + $0x8] sm:$0xff] %vm80, %v472
    %497 = vst.msk [vmem:[%s2 + $0x10] sm:$0xff] %vm80, %v473
    %498 = vst.msk [vmem:[%s2 + $0x18] sm:$0xff] %vm80, %v474
    %499 = vst.msk [vmem:[%s2 + $0x20] sm:$0xff] %vm80, %v475
    %500 = vst.msk [vmem:[%s2 + $0x28] sm:$0xff] %vm80, %v476
    %501 = vst.msk [vmem:[%s2 + $0x30] sm:$0xff] %vm80, %v477
    %502 = vst.msk [vmem:[%s2 + $0x38] sm:$0xff] %vm80, %v478
    %503 = vst.msk [vmem:[%s2 + $0x40] sm:$0xff] %vm80, %v479
    %504 = vst.msk [vmem:[%s2 + $0x48] sm:$0xff] %vm80, %v480
    %505 = vst.msk [vmem:[%s2 + $0x50] sm:$0xff] %vm80, %v481
    %506 = vst.msk [vmem:[%s2 + $0x58] sm:$0xff] %vm80, %v482
    %507 = vst.msk [vmem:[%s2 + $0x60] sm:$0xff] %vm80, %v483
    %508 = vst.msk [vmem:[%s2 + $0x68] sm:$0xff] %vm80, %v484
    %509 = vst.msk [vmem:[%s2 + $0x70] sm:$0xff] %vm80, %v485
    %510 = vst.msk [vmem:[%s2 + $0x78] sm:$0xff] %vm80, %v486
    %511 = vst.msk [vmem:[%s2 + $0x80] sm:$0xff] %vm80, %v487
    %512 = vst.msk [vmem:[%s2 + $0x88] sm:$0xff] %vm80, %v488
    %513 = vst.msk [vmem:[%s2 + $0x90] sm:$0xff] %vm80, %v489
    %514 = vst.msk [vmem:[%s2 + $0x98] sm:$0xff] %vm80, %v490
    %515 = vst.msk [vmem:[%s2 + $0xa0] sm:$0xff] %vm80, %v491
    %516 = vst.msk [vmem:[%s2 + $0xa8] sm:$0xff] %vm80, %v492
    %517 = vst.msk [vmem:[%s2 + $0xb0] sm:$0xff] %vm80, %v493
    %518 = vst.msk [vmem:[%s2 + $0xb8] sm:$0xff] %vm80, %v494
  $region17: #{tpu_custom_call.1} parent=0 // pred_fallthru
    _
  // Predicated region
  $region18: #{tpu_custom_call.1} parent=0 // pred_check
    _
  $region19: #{tpu_custom_call.1} parent=0 // pred_check_branch
    %520 = sbr.rel (0) target = $region21
  $region20: #{tpu_custom_call.1} parent=0 // pred_region
    _
  $region21: #{tpu_custom_call.1} parent=0 // pred_fallthru
    _
  // Predicated region
  $region22: #{tpu_custom_call.1} parent=0 // pred_check
    _
  $region23: #{tpu_custom_call.1} parent=0 // pred_check_branch
    %522 = sbr.rel (0) target = $region25
  $region24: #{tpu_custom_call.1} parent=0 // pred_region
    _
  $region25: #{tpu_custom_call.1} parent=0 // pred_fallthru
    _

</llo_original>
